<compile_context>
chip_gen: v5e
topology: v5e:2x2
jax: 0.10.0
libtpu: 0.0.40
codegen_flags: <defaults>
</compile_context>

<pallas_src>
import jax
import jax.numpy as jnp
from jax.experimental import pallas as pl
from jax.experimental.pallas import tpu as pltpu

EPS = 1e-5


def _ee_reduce_kernel(x_ref, w_ref, b_ref, out_ref, acc_ref):
    """Tiled spatial-sum accumulation + fused (BN-folded) linear at finalize.

    x_ref   : [TB, C, THW]  native dtype   current tile of the feature map
    w_ref   : [C, N]        f32            linear weight with BN scale & 1/HW folded in
    b_ref   : [1, N]        f32            linear bias with BN shift folded in
    out_ref : [TB, N]       f32
    acc_ref : [TB, C]       f32            running spatial sum (resident over HW axis)
    """
    hw_step = pl.program_id(1)

    @pl.when(hw_step == 0)
    def _init():
        acc_ref[...] = jnp.zeros_like(acc_ref)

    x = x_ref[...].astype(jnp.float32)                 # [TB, C, THW]
    acc_ref[...] += jnp.sum(x, axis=-1)                # [TB, C]

    @pl.when(hw_step == pl.num_programs(1) - 1)
    def _finalize():
        logits = jnp.dot(acc_ref[...], w_ref[...],
                         preferred_element_type=jnp.float32) + b_ref[...]
        out_ref[...] = logits.astype(out_ref.dtype)


def early_exit_block(x_nchw, gamma, beta, running_mean, running_var, w, b,
                     *, block_b=8, block_hw=512):
    """x_nchw: [B, C, H, W]; w: [n_classes, C] (PyTorch Linear layout); b: [n_classes]."""
    B, C, H, W = x_nchw.shape
    n_classes = w.shape[0]
    HW = H * W

    # ---- Fold eval-mode BN + 1/(H*W) into the classifier (wrapper-side) ----
    scale = (gamma.astype(jnp.float32)
             * jax.lax.rsqrt(running_var.astype(jnp.float32) + EPS))        # [C]
    shift = beta.astype(jnp.float32) - running_mean.astype(jnp.float32) * scale
    w_t = jnp.transpose(w).astype(jnp.float32)                              # [C, N]
    w_fold = (scale[:, None] * w_t) * (1.0 / HW)                            # [C, N]
    b_fold = (shift @ w_t + b.astype(jnp.float32)).reshape(1, n_classes)    # [1, N]

    # Keep x in its native dtype; cast per-tile inside the kernel.
    x = x_nchw.reshape(B, C, HW)

    # ---- Tile sizes --------------------------------------------------------
    tb = min(block_b, B)
    thw = min(block_hw, HW)
    if thw < HW:                              # tiled lane dim must be a multiple of 128
        thw = max(128, (thw // 128) * 128)

    # Zero-pad tails so tiles divide evenly (zeros do not change the sum).
    hw_pad = pl.cdiv(HW, thw) * thw
    b_pad = pl.cdiv(B, tb) * tb
    if hw_pad != HW or b_pad != B:
        x = jnp.pad(x, ((0, b_pad - B), (0, 0), (0, hw_pad - HW)))

    grid = (b_pad // tb, hw_pad // thw)       # reduction (HW) axis last

    out = pl.pallas_call(
        _ee_reduce_kernel,
        out_shape=jax.ShapeDtypeStruct((b_pad, n_classes), jnp.float32),
        grid_spec=pltpu.PrefetchScalarGridSpec(
            num_scalar_prefetch=0,
            grid=grid,
            in_specs=[
                pl.BlockSpec((tb, C, thw), lambda bi, hi: (bi, 0, hi)),
                pl.BlockSpec((C, n_classes), lambda bi, hi: (0, 0)),
                pl.BlockSpec((1, n_classes), lambda bi, hi: (0, 0)),
            ],
            out_specs=pl.BlockSpec((tb, n_classes), lambda bi, hi: (bi, 0)),
            scratch_shapes=[pltpu.VMEM((tb, C), jnp.float32)],
        ),
        compiler_params=pltpu.CompilerParams(
            dimension_semantics=("parallel", "arbitrary")),
    )(x, w_fold, b_fold)

    return out[:B]


def _reference(x_nchw, gamma, beta, running_mean, running_var, w, b):
    inv_std = 1.0 / jnp.sqrt(running_var + EPS)
    xn = (x_nchw - running_mean[None, :, None, None]) * inv_std[None, :, None, None]
    xn = xn * gamma[None, :, None, None] + beta[None, :, None, None]
    pooled = jnp.mean(xn, axis=(2, 3))                 # [B, C]
    return pooled @ w.T + b[None, :]


if __name__ == "__main__":
    # Small shapes consistent with the module: input_shape = (_, C, H, W).
    B, C, H, W = 2, 4, 16, 16
    n_classes = 10

    key = jax.random.PRNGKey(0)
    kx, kg, kb, km, kv, kw, kbl = jax.random.split(key, 7)

    x = jax.random.normal(kx, (B, C, H, W), dtype=jnp.float32)

    # Deterministic synthetic parameters (BN over C, Linear(C -> n_classes)
    # because adaptive pooling collapses spatial dims to 1x1).
    gamma = 1.0 + 0.1 * jax.random.normal(kg, (C,), dtype=jnp.float32)
    beta = 0.1 * jax.random.normal(kb, (C,), dtype=jnp.float32)
    running_mean = 0.05 * jax.random.normal(km, (C,), dtype=jnp.float32)
    running_var = 1.0 + 0.1 * jnp.abs(jax.random.normal(kv, (C,), dtype=jnp.float32))
    w = 0.1 * jax.random.normal(kw, (n_classes, C), dtype=jnp.float32)
    b = 0.1 * jax.random.normal(kbl, (n_classes,), dtype=jnp.float32)

    ref = _reference(x, gamma, beta, running_mean, running_var, w, b)

    # Multi-step reduction path (HW = 256 -> two 128-lane tiles).
    out_multi = early_exit_block(x, gamma, beta, running_mean, running_var, w, b,
                                 block_hw=128)
    out_multi = jax.block_until_ready(out_multi)
    assert out_multi.shape == (B, n_classes)
    assert jnp.allclose(out_multi, ref, atol=1e-4, rtol=1e-4), "mismatch (tiled HW)"

    # Single-tile path (default block sizes).
    out_single = early_exit_block(x, gamma, beta, running_mean, running_var, w, b)
    out_single = jax.block_until_ready(out_single)
    assert jnp.allclose(out_single, ref, atol=1e-4, rtol=1e-4), "mismatch (single tile)"

    print("KERNEL_OK")
</pallas_src>

<mosaic_0001>
module attributes {stable_mosaic.version = 11 : i64} {
  func.func @_ee_reduce_kernel(%arg0: i32, %arg1: i32, %arg2: memref<2x4x128xf32, #tpu.memory_space<vmem>>, %arg3: memref<4x10xf32, #tpu.memory_space<vmem>>, %arg4: memref<1x10xf32, #tpu.memory_space<vmem>>, %arg5: memref<2x10xf32, #tpu.memory_space<vmem>>, %arg6: memref<2x4xf32, #tpu.memory_space<vmem>>) attributes {dimension_semantics = [#tpu.dimension_semantics<parallel>, #tpu.dimension_semantics<arbitrary>], iteration_bounds = array<i64: 1, 2>, scalar_prefetch = 0 : i64, scratch_operands = 1 : i64, tpu.core_type = #tpu.core_type<tc>, window_params = [{transform_indices = @transform_0, window_bounds = array<i64: 2, 4, 128>}, {pipeline_mode = #tpu.pipeline_mode<synchronous>, transform_indices = @transform_1, window_bounds = array<i64: 4, 10>}, {pipeline_mode = #tpu.pipeline_mode<synchronous>, transform_indices = @transform_2, window_bounds = array<i64: 1, 10>}, {transform_indices = @transform_3, window_bounds = array<i64: 2, 10>}]} {
    %c0_i32 = arith.constant 0 : i32
    %0 = arith.cmpi eq, %arg1, %c0_i32 : i32
    %1 = arith.extui %0 : i1 to i32
    %c0_i32_0 = arith.constant 0 : i32
    %2 = arith.cmpi ne, %1, %c0_i32_0 : i32
    scf.if %2 {
      %cst_8 = arith.constant 0.000000e+00 : f32
      %11 = vector.broadcast %cst_8 : f32 to vector<2x4xf32>
      %c0_9 = arith.constant 0 : index
      %c0_10 = arith.constant 0 : index
      %12 = vector.load %arg6[%c0_9, %c0_10] : memref<2x4xf32, #tpu.memory_space<vmem>>, vector<2x4xf32>
      tpu.vector_store %arg6[%c0_9, %c0_10], %11 {strides = array<i32>} : memref<2x4xf32, #tpu.memory_space<vmem>>, vector<2x4xf32>,
    } else {
    }
    %c0 = arith.constant 0 : index
    %c0_1 = arith.constant 0 : index
    %c0_2 = arith.constant 0 : index
    %3 = vector.load %arg2[%c0, %c0_1, %c0_2] : memref<2x4x128xf32, #tpu.memory_space<vmem>>, vector<2x4x128xf32>
    %c0_3 = arith.constant 0 : index
    %c0_4 = arith.constant 0 : index
    %4 = vector.load %arg6[%c0_3, %c0_4] : memref<2x4xf32, #tpu.memory_space<vmem>>, vector<2x4xf32>
    %cst = arith.constant dense<0.000000e+00> : vector<2x4xf32>
    %5 = vector.multi_reduction <add>, %3, %cst [2] : vector<2x4x128xf32> to vector<2x4xf32>
    %6 = arith.addf %4, %5 : vector<2x4xf32>
    %c0_5 = arith.constant 0 : index
    %c0_6 = arith.constant 0 : index
    %7 = vector.load %arg6[%c0_5, %c0_6] : memref<2x4xf32, #tpu.memory_space<vmem>>, vector<2x4xf32>
    tpu.vector_store %arg6[%c0_5, %c0_6], %6 {strides = array<i32>} : memref<2x4xf32, #tpu.memory_space<vmem>>, vector<2x4xf32>,
    %c1_i32 = arith.constant 1 : i32
    %8 = arith.cmpi eq, %arg1, %c1_i32 : i32
    %9 = arith.extui %8 : i1 to i32
    %c0_i32_7 = arith.constant 0 : i32
    %10 = arith.cmpi ne, %9, %c0_i32_7 : i32
    scf.if %10 {
      %c0_8 = arith.constant 0 : index
      %c0_9 = arith.constant 0 : index
      %11 = vector.load %arg6[%c0_8, %c0_9] : memref<2x4xf32, #tpu.memory_space<vmem>>, vector<2x4xf32>
      %c0_10 = arith.constant 0 : index
      %c0_11 = arith.constant 0 : index
      %12 = vector.load %arg3[%c0_10, %c0_11] : memref<4x10xf32, #tpu.memory_space<vmem>>, vector<4x10xf32>
      %cst_12 = arith.constant dense<0.000000e+00> : vector<2x10xf32>
      %13 = tpu.matmul %11, %12, %cst_12 {dimension_numbers = #tpu.dot_dimension_numbers<[1], [0], [0], [1], [0, 0, 1, 1], [], []>} : vector<2x4xf32>, vector<4x10xf32>, vector<2x10xf32> -> vector<2x10xf32>
      %c0_13 = arith.constant 0 : index
      %c0_14 = arith.constant 0 : index
      %14 = vector.load %arg4[%c0_13, %c0_14] : memref<1x10xf32, #tpu.memory_space<vmem>>, vector<1x10xf32>
      %15 = vector.broadcast %14 : vector<1x10xf32> to vector<2x10xf32>
      %16 = arith.addf %13, %15 : vector<2x10xf32>
      %c0_15 = arith.constant 0 : index
      %c0_16 = arith.constant 0 : index
      %17 = vector.load %arg5[%c0_15, %c0_16] : memref<2x10xf32, #tpu.memory_space<vmem>>, vector<2x10xf32>
      tpu.vector_store %arg5[%c0_15, %c0_16], %16 {strides = array<i32>} : memref<2x10xf32, #tpu.memory_space<vmem>>, vector<2x10xf32>,
    } else {
    }
    return
  }
  func.func @transform_0(%arg0: i32, %arg1: i32) -> (i32, i32, i32) {
    %c0_i32 = arith.constant 0 : i32
    %c0_i32_0 = arith.constant 0 : i32
    return %arg0, %c0_i32, %arg1 : i32, i32, i32
  }
  func.func @transform_1(%arg0: i32, %arg1: i32) -> (i32, i32) {
    %c0_i32 = arith.constant 0 : i32
    %c0_i32_0 = arith.constant 0 : i32
    %c0_i32_1 = arith.constant 0 : i32
    return %c0_i32, %c0_i32_0 : i32, i32
  }
  func.func @transform_2(%arg0: i32, %arg1: i32) -> (i32, i32) {
    %c0_i32 = arith.constant 0 : i32
    %c0_i32_0 = arith.constant 0 : i32
    %c0_i32_1 = arith.constant 0 : i32
    return %c0_i32, %c0_i32_0 : i32, i32
  }
  func.func @transform_3(%arg0: i32, %arg1: i32) -> (i32, i32) {
    %c0_i32 = arith.constant 0 : i32
    %c0_i32_0 = arith.constant 0 : i32
    return %arg0, %c0_i32 : i32, i32
  }
}

</mosaic_0001>

<llo_original>
// kernel: tpu_custom_call.1
$region0: #{tpu_custom_call.1}
  #allocation0 [shape = 'u32[]', space=smem, size = 0x4, offset = 0x4, fixed_abs, tag = 'smem constant byte address 0x4 - core index']
  #allocation1 [shape = 'u32[72,128]{1,0:T(1,128)}', space=vmem, size = 0x9000, scoped, tag = 'internal scratch']
  #allocation2 [shape = 'f32[2,4]{1,0:T(2,128)}', space=vmem, size = 0x400, scoped, tag = 'scratch operand']
  %s0 = inlined_call_operand.hbm [shape: f32[2,4,256], index: 0, kind: input, shape index: {}]
  %s1 = inlined_call_operand.hbm [shape: f32[4,10], index: 1, kind: input, shape index: {}]
  %s2 = inlined_call_operand.vmem [shape: f32[1,10], index: 2, kind: input, shape index: {}]
  %s3 = inlined_call_operand.hbm [shape: f32[2,10], index: 3, kind: output, shape index: {}]
  %s4 = sld [smem:[#allocation0]]
  $region61: #{tpu_custom_call.1} parent=0
    _
  %s6 = ssub.s32 1, %s4
  %s7 = scalar_select 0, %s6, %s4
  $region1: #{tpu_custom_call.1} parent=0
    #allocation3 [shape = 'u8[8192]{0}', space=vmem, size = 0x2000, scoped, tag = 'input window, operand 0']
    #allocation4 [shape = 's32[2]{0}', space=sflag, size = 0x8, scoped, tag = 'scoped memory for tpu_custom_call.1']
    #allocation5 [shape = 's32[2]{0}', space=sflag, size = 0x8, scoped, tag = 'scoped memory for tpu_custom_call.1']
    #allocation6 [shape = 'u8[2048]{0}', space=vmem, size = 0x800, scoped, tag = 'input window, operand 1, single buffered']
    #allocation7 [shape = 's32[1]{0}', space=sflag, size = 0x4, scoped, tag = 'scoped memory for tpu_custom_call.1']
    #allocation8 [shape = 'u8[1024]{0}', space=vmem, size = 0x400, scoped, tag = 'output window, operand 0, single buffered']
    %8 = vsyncpa [#allocation4], 0
    %s9 = scalar_lea.sflag [#allocation4], 1
    %10 = vsyncpa %s9, 0
    %11 = vsyncpa [#allocation7], 0
    %12 = vsyncpa [#allocation5], 0
    loop: start=0, step=1, limit=4
    $region2: #{tpu_custom_call.1} parent=1 // loop_pre_header
      _
    $region3: #{tpu_custom_call.1} parent=1 // loop_header
      %s14 = sphi 0, %s18
      %p15 = scmp.ge.s32.totalorder %s14, 4
      %s21 = sphi 0, %s33
      %s22 = sphi 0, %s29
      %s23 = sphi 0, %s21
      %s24 = sphi 0, %s22
      %s25 = sphi 0, %s23
      %s26 = sphi 0, %s24
      %s38 = sphi 0, %s40
      %s41 = sphi 0, %s38
      %s42 = sphi 0, %s41
      %s58 = sphi 0, %s42
      %s62 = sphi 0, %s62
      %s64 = sphi 0, %s62
      %s65 = sphi 0, %s64
      %s79 = sphi 0, %s65
      %s83 = sphi 0, %s83
      %s85 = sphi 0, %s83
      %s86 = sphi 0, %s85
      %s100 = sphi 0, %s86
      %s106 = sphi 0, %s108
      %s109 = sphi 0, %s106
      %s110 = sphi 0, %s109
      %s126 = sphi 0, %s110
    $region4: #{tpu_custom_call.1} parent=1 // loop_header_branch
      %17 = sbr.rel (%p15) target = $region8
    $region5: #{tpu_custom_call.1} parent=1 // loop_body
      %s19 = ssub.s32 %s14, 1
      %s20 = ssub.s32 %s14, 2
      %s27 = sadd.s32 1, %s22
      %p28 = scmp.ge.s32.totalorder %s27, 2
      %s29 = scalar_select %p28, 0, %s27
      %s30 = sadd.s32 1, %s21
      %s31 = scalar_select %p28, %s30, %s21
      %p32 = scmp.ge.s32.totalorder %s31, 1
      %s33 = scalar_select %p32, 0, %s31
      %s34 = ssub.s32 %s21, %s33
      %s35 = ssub.s32 %s22, %s29
      %s36 = sor.u32 %s34, %s35
      %p37 = scmp.eq.s32.totalorder %s36, 0
      %s39 = sadd.s32 %s38, 1
      %s40 = scalar_select %p37, %s38, %s39
      %p43 = pneg %p37
      %p44 = scmp.eq.s32.totalorder %s14, 1
      %p45 = por %p43, %p44
      %p46 = scmp.ne.s32.totalorder %s38, %s41
      %p47 = scmp.eq.s32.totalorder %s14, 0
      %p48 = por %p46, %p47
      %p49 = scmp.ne.s32.totalorder %s38, %s41
      %p50 = scmp.eq.s32.totalorder %s19, 1
      %p51 = por %p49, %p50
      %p52 = scmp.ne.s32.totalorder %s41, %s42
      %p53 = scmp.eq.s32.totalorder %s19, 0
      %p54 = por %p52, %p53
      %p55 = scmp.ne.s32.totalorder %s41, %s42
      %p56 = scmp.eq.s32.totalorder %s20, 1
      %p57 = por %p55, %p56
      %p59 = scmp.ne.s32.totalorder %s42, %s58
      %p60 = scmp.eq.s32.totalorder %s20, 0
      %p61 = por %p59, %p60
      %s63 = sadd.s32 %s62, 1
      %p66 = scmp.eq.s32.totalorder %s14, 1
      %p67 = scmp.ne.s32.totalorder %s62, %s64
      %p68 = scmp.eq.s32.totalorder %s14, 0
      %p69 = por %p67, %p68
      %p70 = scmp.ne.s32.totalorder %s62, %s64
      %p71 = scmp.eq.s32.totalorder %s19, 1
      %p72 = por %p70, %p71
      %p73 = scmp.ne.s32.totalorder %s64, %s65
      %p74 = scmp.eq.s32.totalorder %s19, 0
      %p75 = por %p73, %p74
      %p76 = scmp.ne.s32.totalorder %s64, %s65
      %p77 = scmp.eq.s32.totalorder %s20, 1
      %p78 = por %p76, %p77
      %p80 = scmp.ne.s32.totalorder %s65, %s79
      %p81 = scmp.eq.s32.totalorder %s20, 0
      %p82 = por %p80, %p81
      %s84 = sadd.s32 %s83, 1
      %p87 = scmp.eq.s32.totalorder %s14, 1
      %p88 = scmp.ne.s32.totalorder %s83, %s85
      %p89 = scmp.eq.s32.totalorder %s14, 0
      %p90 = por %p88, %p89
      %p91 = scmp.ne.s32.totalorder %s83, %s85
      %p92 = scmp.eq.s32.totalorder %s19, 1
      %p93 = por %p91, %p92
      %p94 = scmp.ne.s32.totalorder %s85, %s86
      %p95 = scmp.eq.s32.totalorder %s19, 0
      %p96 = por %p94, %p95
      %p97 = scmp.ne.s32.totalorder %s85, %s86
      %p98 = scmp.eq.s32.totalorder %s20, 1
      %p99 = por %p97, %p98
      %p101 = scmp.ne.s32.totalorder %s86, %s100
      %p102 = scmp.eq.s32.totalorder %s20, 0
      %p103 = por %p101, %p102
      %s104 = ssub.s32 %s21, %s33
      %p105 = scmp.eq.s32.totalorder %s104, 0
      %s107 = sadd.s32 %s106, 1
      %s108 = scalar_select %p105, %s106, %s107
      %p111 = pneg %p105
      %p112 = scmp.eq.s32.totalorder %s14, 1
      %p113 = por %p111, %p112
      %p114 = scmp.ne.s32.totalorder %s106, %s109
      %p115 = scmp.eq.s32.totalorder %s14, 0
      %p116 = por %p114, %p115
      %p117 = scmp.ne.s32.totalorder %s106, %s109
      %p118 = scmp.eq.s32.totalorder %s19, 1
      %p119 = por %p117, %p118
      %p120 = scmp.ne.s32.totalorder %s109, %s110
      %p121 = scmp.eq.s32.totalorder %s19, 0
      %p122 = por %p120, %p121
      %p123 = scmp.ne.s32.totalorder %s109, %s110
      %p124 = scmp.eq.s32.totalorder %s20, 1
      %p125 = por %p123, %p124
      %p127 = scmp.ne.s32.totalorder %s110, %s126
      %p128 = scmp.eq.s32.totalorder %s20, 0
      %p129 = por %p127, %p128
      %p130 = scmp.le.s32.totalorder 1, %s14
      %p131 = scmp.lt.s32.totalorder %s14, 3
      %p132 = pnand %p130, %p131
      %p133 = pneg %p132
      // Predicated region
      $region9: #{tpu_custom_call.1} parent=5 // pred_check
        _
      $region10: #{tpu_custom_call.1} parent=5 // pred_check_branch
        %135 = sbr.rel (%p132) target = $region12
      $region11: #{tpu_custom_call.1} parent=5 // pred_region
        %s136 = ssub.s32 %s14, 1
        // Predicated region
        $region13: #{tpu_custom_call.1} parent=11 // pred_check
          %p137 = pneg %p75
        $region14: #{tpu_custom_call.1} parent=11 // pred_check_branch
          %139 = sbr.rel (%p137) target = $region16
        $region15: #{tpu_custom_call.1} parent=11 // pred_region
          %141 = vsyncadd [#allocation7], 0
          %s143 = sshll.u32 %s1, 4
          %s144 = int_to_ptr.hbm [resolvable:$true] %s143
          %s145 = sshll.u32 [#allocation6], 4
          %s146 = int_to_ptr.vmem [resolvable:$true] %s145
          %148 = dma.hbm_to_vmem [thread:$0]  %s144, 64, %s146, [#allocation7]
        $region16: #{tpu_custom_call.1} parent=11 // pred_fallthru
          _
        // Predicated region
        $region17: #{tpu_custom_call.1} parent=11 // pred_check
          %p149 = pneg %p96
        $region18: #{tpu_custom_call.1} parent=11 // pred_check_branch
          %151 = sbr.rel (%p149) target = $region20
        $region19: #{tpu_custom_call.1} parent=11 // pred_region
          _
        $region20: #{tpu_custom_call.1} parent=11 // pred_fallthru
          _
      $region12: #{tpu_custom_call.1} parent=5 // pred_fallthru
        _
      %p152 = scmp.lt.s32.totalorder %s14, 2
      // Predicated region
      $region21: #{tpu_custom_call.1} parent=5 // pred_check
        %p153 = pneg %p152
      $region22: #{tpu_custom_call.1} parent=5 // pred_check_branch
        %155 = sbr.rel (%p153) target = $region24
      $region23: #{tpu_custom_call.1} parent=5 // pred_region
        // Predicated region
        $region25: #{tpu_custom_call.1} parent=23 // pred_check
          %p156 = pneg %p48
        $region26: #{tpu_custom_call.1} parent=23 // pred_check_branch
          %158 = sbr.rel (%p156) target = $region28
        $region27: #{tpu_custom_call.1} parent=23 // pred_region
          %s159 = sand.u32 %s38, 1
          %s160 = scalar_lea.sflag [#allocation4], %s159
          %s161 = sand.u32 %s38, 1
          %s162 = smul.addr %s161, 8
          %s163 = scalar_lea.vmem [#allocation3], %s162
          %s164 = smul.u32 2, %s21
          %166 = vsyncadd %s160, 0
          %s167 = smul.addr %s164, 2
          %s168 = sadd.s32 %s22, %s167
          %s169 = smul.addr %s168, 4
          %s170 = scalar_lea.hbm %s0, %s169
          %s171 = sshll.u32 %s170, 4
          %s172 = int_to_ptr.hbm [resolvable:$true] %s171
          %s173 = sshll.u32 %s163, 4
          %s174 = int_to_ptr.vmem [resolvable:$true] %s173
          %179 = dma.hbm_to_vmem [thread:$0]  %s172, 128, %s174, %s160, 128, 64, 4
        $region28: #{tpu_custom_call.1} parent=23 // pred_fallthru
          _
      $region24: #{tpu_custom_call.1} parent=5 // pred_fallthru
        _
      %p180 = scmp.le.s32.totalorder 1, %s14
      %p181 = scmp.lt.s32.totalorder %s14, 3
      %p182 = pnand %p180, %p181
      %p183 = pneg %p182
      // Predicated region
      $region29: #{tpu_custom_call.1} parent=5 // pred_check
        _
      $region30: #{tpu_custom_call.1} parent=5 // pred_check_branch
        %185 = sbr.rel (%p182) target = $region32
      $region31: #{tpu_custom_call.1} parent=5 // pred_region
        %s186 = ssub.s32 %s14, 1
        %s187 = sand.u32 %s41, 1
        %s188 = scalar_lea.sflag [#allocation4], %s187
        %s189 = sand.u32 %s41, 1
        %s190 = smul.addr %s189, 8
        %s191 = scalar_lea.vmem [#allocation3], %s190
        // Predicated region
        $region33: #{tpu_custom_call.1} parent=31 // pred_check
          %p192 = pneg %p54
        $region34: #{tpu_custom_call.1} parent=31 // pred_check_branch
          %194 = sbr.rel (%p192) target = $region36
        $region35: #{tpu_custom_call.1} parent=31 // pred_region
          %196 = dma.done %s188, 128
        $region36: #{tpu_custom_call.1} parent=31 // pred_fallthru
          _
        // Predicated region
        $region37: #{tpu_custom_call.1} parent=31 // pred_check
          %p197 = pneg %p75
        $region38: #{tpu_custom_call.1} parent=31 // pred_check_branch
          %199 = sbr.rel (%p197) target = $region40
        $region39: #{tpu_custom_call.1} parent=31 // pred_region
          %201 = dma.done [#allocation7], 64
        $region40: #{tpu_custom_call.1} parent=31 // pred_fallthru
          _
        %s202 = sand.u32 %s41, 1
        %s203 = scalar_lea.sflag [#allocation4], %s202
        %s204 = sand.u32 %s41, 1
        %s205 = smul.addr %s204, 8
        %s206 = scalar_lea.vmem [#allocation3], %s205
        %p207 = pneg %p54
        %p208 = pneg %p51
        %p209 = pneg %p75
        %p210 = pneg %p72
        %p211 = pneg %p96
        %p212 = pneg %p93
        %p213 = pneg %p122
        %p214 = pneg %p119
        %s215 = smul.u32 2, %s23
        %p216 = scmp.eq.s32.totalorder %s24, 0
        // Predicated region
        $region41: #{tpu_custom_call.1} parent=31 // pred_check
          %p217 = pneg %p216
        $region42: #{tpu_custom_call.1} parent=31 // pred_check_branch
          %219 = sbr.rel (%p217) target = $region44
        $region43: #{tpu_custom_call.1} parent=31 // pred_region
          %vm220 = vcmask 25600
          %221 = vst.msk [vmem:[#allocation2] sm:$0x3] %vm220, 0.0
        $region44: #{tpu_custom_call.1} parent=31 // pred_fallthru
          _
        %v222 = vld [vmem:[%s191] sm:$0xf]
        %v223 = vld [vmem:[%s191 + $0x4] sm:$0xf]
        %v224 = vld [vmem:[#allocation2] sm:$0x3]
        %vm225 = vcmask 1043456
        %v226 = vsel %vm225, %v222, 0.0
        %227 = vadd.xlane.f32.xlu0 %v226
        %v228 = vpop.xlane.xlu0 %227
        %v229 = vsel %vm225, %v223, 0.0
        %230 = vadd.xlane.f32.xlu0 %v229
        %v231 = vpop.xlane.xlu0 %230
        %v234 = vlaneseq
        %v235 = vand.u32 %v234, 127
        %v236 = vperm.slane %v228, %v235
        %v237 = vperm.slane %v231, %v235
        %vm238 = vcmask 1041409
        %v239 = vsel %vm238, %v237, %v236
        %v241 = vadd.f32 %v224, %v239
        %vm242 = vcmask 25600
        %243 = vst.msk [vmem:[#allocation2] sm:$0x3] %vm242, %v241
        %p244 = scmp.eq.s32.totalorder %s24, 1
        // Predicated region
        $region45: #{tpu_custom_call.1} parent=31 // pred_check
          %p245 = pneg %p244
        $region46: #{tpu_custom_call.1} parent=31 // pred_check_branch
          %247 = sbr.rel (%p245) target = $region48
        $region47: #{tpu_custom_call.1} parent=31 // pred_region
          %v248 = vld [vmem:[#allocation2] sm:$0x3]
          %v249 = vld [vmem:[#allocation6] sm:$0xf]
          %v250 = vld [vmem:[%s2] sm:$0x1]
          %v252 = vperm.slane %v250, 0
          %vm254 = vcmask 31744
          %v256 = vsel %vm254, %v248, 0
          %v259 = vsel %vm225, %v249, 0
          %261 = vmatpush.msra.mxu0 0.0
          %262 = vmatpush.msra.mxu0 0.0
          %263 = vmatpush.msra.mxu0 0.0
          %264 = vmatpush.msra.mxu0 0.0
          %265 = vmatpush.msra.mxu0 0.0
          %266 = vmatpush.msra.mxu0 0.0
          %267 = vmatpush.msra.mxu0 0.0
          %268 = vmatpush.msra.mxu0 0.0
          %269 = vmatpush.msra.mxu0 0.0
          %270 = vmatpush.msra.mxu0 0.0
          %271 = vmatpush.msra.mxu0 0.0
          %272 = vmatpush.msra.mxu0 0.0
          %273 = vmatpush.msra.mxu0 0.0
          %274 = vmatpush.msra.mxu0 0.0
          %275 = vmatpush.msra.mxu0 0.0
          %276 = vmatpush.msra.mxu0 %v259
          %277 = vmatmul.f32.gmra.mxu0 %v256
          %v278 = vpop.f32.mrf.mxu0
          %v279 = vadd.f32 %v252, %v278
          %280 = vdwg.mxu0
          %vm281 = vcmask 74752
          %282 = vst.msk [vmem:[#allocation8] sm:$0x3] %vm281, %v279
        $region48: #{tpu_custom_call.1} parent=31 // pred_fallthru
          _
        // Predicated region
        $region49: #{tpu_custom_call.1} parent=31 // pred_check
          %p283 = pneg %p119
        $region50: #{tpu_custom_call.1} parent=31 // pred_check_branch
          %285 = sbr.rel (%p283) target = $region52
        $region51: #{tpu_custom_call.1} parent=31 // pred_region
          %287 = vsyncadd [#allocation5], 0
          %s288 = smul.addr %s23, 2
          %s289 = scalar_lea.hbm %s3, %s288
          %s291 = sshll.u32 [#allocation8], 4
          %s292 = int_to_ptr.vmem [resolvable:$true] %s291
          %s293 = sshll.u32 %s289, 4
          %s294 = int_to_ptr.hbm [resolvable:$true] %s293
          %296 = dma.vmem_to_hbm [thread:$0]  %s292, 32, %s294, [#allocation5]
        $region52: #{tpu_custom_call.1} parent=31 // pred_fallthru
          _
        // Predicated region
        $region53: #{tpu_custom_call.1} parent=31 // pred_check
          %p297 = pneg %p119
        $region54: #{tpu_custom_call.1} parent=31 // pred_check_branch
          %299 = sbr.rel (%p297) target = $region56
        $region55: #{tpu_custom_call.1} parent=31 // pred_region
          %301 = dma.done [#allocation5], 32
        $region56: #{tpu_custom_call.1} parent=31 // pred_fallthru
          _
      $region32: #{tpu_custom_call.1} parent=5 // pred_fallthru
        _
      %p302 = scmp.le.s32.totalorder 2, %s14
      // Predicated region
      $region57: #{tpu_custom_call.1} parent=5 // pred_check
        %p303 = pneg %p302
      $region58: #{tpu_custom_call.1} parent=5 // pred_check_branch
        %305 = sbr.rel (%p303) target = $region60
      $region59: #{tpu_custom_call.1} parent=5 // pred_region
        %s306 = ssub.s32 %s14, 2
      $region60: #{tpu_custom_call.1} parent=5 // pred_fallthru
        _
    $region6: #{tpu_custom_call.1} parent=1 // loop_footer
      %s18 = sadd.s32 1, %s14
    $region7: #{tpu_custom_call.1} parent=1 // loop_footer_branch
      %13 = sbr.rel target = $region3
    $region8: #{tpu_custom_call.1} parent=1 // loop_exit
      _
    %307 = vsyncpa [#allocation4], 1
    %s308 = scalar_lea.sflag [#allocation4], 1
    %309 = vsyncpa %s308, 1
    %310 = vsyncpa [#allocation7], 1
    %311 = vsyncpa [#allocation5], 1
    %s312 = scalar_lea.sflag [#allocation5], 1
    %313 = vsyncpa %s312, 1

</llo_original>
